<compile_context>
chip_gen: v6e
topology: v6e:2x2x1
jax: 0.10.0
libtpu: 0.0.40
codegen_flags: <defaults>
</compile_context>

<pallas_src>
import jax
import jax.numpy as jnp
from jax import lax
from jax.experimental import pallas as pl
from jax.experimental.pallas import tpu as pltpu


def _round_up(x: int, m: int) -> int:
    return ((x + m - 1) // m) * m


def _bayesian_linear_kernel(x_ref, wmu_ref, wrho_ref, eps_w_ref,
                            bmu_ref, brho_ref, eps_b_ref, o_ref, acc_ref):
    k = pl.program_id(2)
    nk = pl.num_programs(2)

    @pl.when(k == 0)
    def _():
        acc_ref[...] = jnp.zeros_like(acc_ref)

    # Reparameterized weight sample in f32 (stable softplus), cast to bf16 for
    # the MXU.  Tile shape is (tn, tk) in the natural (out, in) layout.
    w_sigma = jax.nn.softplus(wrho_ref[...])
    w_tile = (wmu_ref[...] + w_sigma * eps_w_ref[...]).astype(jnp.bfloat16)
    x_tile = x_ref[...].astype(jnp.bfloat16)                    # (tm, tk)

    # x @ weight.T expressed directly as a contraction on dim 1 of both
    # operands -- no transposed weight tile is materialized.
    acc_ref[...] += lax.dot_general(
        x_tile, w_tile,
        dimension_numbers=(((1,), (1,)), ((), ())),
        preferred_element_type=jnp.float32)                     # (tm, tn) f32

    @pl.when(k == nk - 1)
    def _():
        b_sigma = jax.nn.softplus(brho_ref[...])
        bias = bmu_ref[...] + b_sigma * eps_b_ref[...]          # (1, tn) f32
        o_ref[...] = (acc_ref[...] + bias).astype(o_ref.dtype)


def bayesian_linear(x, weight_mu, weight_rho, eps_w, bias_mu, bias_rho, eps_b,
                    *, block_m=128, block_n=128, block_k=128):
    """x: (B, I); weight_*: (O, I); bias_*: (O,); returns (B, O) float32."""
    B, I = x.shape
    O = weight_mu.shape[0]

    # MXU/lane-friendly padding: all three problem dims rounded up to the tile
    # sizes.  Padded mu/eps entries are 0, so padded rows/cols contribute
    # exactly 0 to the matmul and are sliced away at the end.
    Bp = _round_up(B, block_m)
    Op = _round_up(O, block_n)
    Ip = _round_up(I, block_k)

    # Keep the whole (padded) batch in one M tile when it is small enough: the
    # sampled-weight softplus/reparam then runs exactly once per weight tile.
    tm = Bp if Bp <= 512 else block_m
    Bp = _round_up(Bp, tm)

    xp   = jnp.pad(x,          ((0, Bp - B), (0, Ip - I)))
    wmu  = jnp.pad(weight_mu,  ((0, Op - O), (0, Ip - I)))
    wrho = jnp.pad(weight_rho, ((0, Op - O), (0, Ip - I)))
    ew   = jnp.pad(eps_w,      ((0, Op - O), (0, Ip - I)))
    bmu  = jnp.pad(bias_mu,  (0, Op - O)).reshape(1, Op)
    brho = jnp.pad(bias_rho, (0, Op - O)).reshape(1, Op)
    eb   = jnp.pad(eps_b,    (0, Op - O)).reshape(1, Op)

    grid = (Bp // tm, Op // block_n, Ip // block_k)
    ni, nj, nk = grid

    flops = 2 * Bp * Op * Ip
    transcendentals = ni * Op * Ip + Op          # softplus per weight/bias elem
    bytes_accessed = (Bp * Ip * 4                # x
                      + 3 * ni * Op * Ip * 4     # mu / rho / eps streams
                      + 3 * Op * 4               # bias params
                      + Bp * Op * 4)             # output

    out = pl.pallas_call(
        _bayesian_linear_kernel,
        out_shape=jax.ShapeDtypeStruct((Bp, Op), jnp.float32),
        grid_spec=pltpu.PrefetchScalarGridSpec(
            num_scalar_prefetch=0,
            grid=grid,
            in_specs=[
                pl.BlockSpec((tm, block_k),      lambda i, j, k: (i, k)),  # x
                pl.BlockSpec((block_n, block_k), lambda i, j, k: (j, k)),  # w_mu
                pl.BlockSpec((block_n, block_k), lambda i, j, k: (j, k)),  # w_rho
                pl.BlockSpec((block_n, block_k), lambda i, j, k: (j, k)),  # eps_w
                pl.BlockSpec((1, block_n),       lambda i, j, k: (0, j)),  # b_mu
                pl.BlockSpec((1, block_n),       lambda i, j, k: (0, j)),  # b_rho
                pl.BlockSpec((1, block_n),       lambda i, j, k: (0, j)),  # eps_b
            ],
            out_specs=pl.BlockSpec((tm, block_n), lambda i, j, k: (i, j)),
            scratch_shapes=[pltpu.VMEM((tm, block_n), jnp.float32)],
        ),
        compiler_params=pltpu.CompilerParams(
            dimension_semantics=("parallel", "parallel", "arbitrary"),
            vmem_limit_bytes=48 * 1024 * 1024,
        ),
        cost_estimate=pl.CostEstimate(flops=flops,
                                      transcendentals=transcendentals,
                                      bytes_accessed=bytes_accessed),
    )(xp, wmu, wrho, ew, bmu, brho, eb)

    return out[:B, :O]


if __name__ == "__main__":
    # Small, PyTorch-consistent shapes: batch=8, in_features=32, out_features=32
    B, IN, OUT = 8, 32, 32

    key = jax.random.PRNGKey(0)
    k_x, k_wmu, k_wrho, k_bmu, k_brho, k_ew, k_eb = jax.random.split(key, 7)

    # Deterministic parameter init mirroring __init__: randn * 0.1
    x = jax.random.normal(k_x, (B, IN), dtype=jnp.float32)
    weight_mu = jax.random.normal(k_wmu, (OUT, IN), dtype=jnp.float32) * 0.1
    weight_rho = jax.random.normal(k_wrho, (OUT, IN), dtype=jnp.float32) * 0.1
    bias_mu = jax.random.normal(k_bmu, (OUT,), dtype=jnp.float32) * 0.1
    bias_rho = jax.random.normal(k_brho, (OUT,), dtype=jnp.float32) * 0.1

    # Noise for the reparameterization trick (torch.randn_like equivalents)
    eps_w = jax.random.normal(k_ew, (OUT, IN), dtype=jnp.float32)
    eps_b = jax.random.normal(k_eb, (OUT,), dtype=jnp.float32)

    y = bayesian_linear(x, weight_mu, weight_rho, eps_w, bias_mu, bias_rho, eps_b)
    jax.block_until_ready(y)
    assert y.shape == (B, OUT)

    # Reference sampled parameters (plain JAX)
    w_sigma = jax.nn.softplus(weight_rho)
    b_sigma = jax.nn.softplus(bias_rho)
    w = weight_mu + w_sigma * eps_w
    b = bias_mu + b_sigma * eps_b

    # Tight check against a reference that uses the same math path
    # (bf16 MXU operands, f32 accumulation).
    y_ref_bf16 = jnp.dot(x.astype(jnp.bfloat16), w.astype(jnp.bfloat16).T,
                         preferred_element_type=jnp.float32) + b
    assert jnp.allclose(y, y_ref_bf16, atol=1e-3, rtol=1e-3)

    # Sanity check against the pure-f32 PyTorch-style forward (bf16 MXU
    # quantization bounded to <2% relative error for these magnitudes).
    y_ref_f32 = x @ w.T + b
    rel_err = jnp.linalg.norm(y - y_ref_f32) / jnp.linalg.norm(y_ref_f32)
    assert rel_err < 2e-2

    print("KERNEL_OK")
</pallas_src>

<mosaic_0001>
module attributes {stable_mosaic.version = 11 : i64} {
  func.func @_bayesian_linear_kernel(%arg0: i32, %arg1: i32, %arg2: i32, %arg3: memref<128x128xf32, #tpu.memory_space<vmem>>, %arg4: memref<128x128xf32, #tpu.memory_space<vmem>>, %arg5: memref<128x128xf32, #tpu.memory_space<vmem>>, %arg6: memref<128x128xf32, #tpu.memory_space<vmem>>, %arg7: memref<1x128xf32, #tpu.memory_space<vmem>>, %arg8: memref<1x128xf32, #tpu.memory_space<vmem>>, %arg9: memref<1x128xf32, #tpu.memory_space<vmem>>, %arg10: memref<128x128xf32, #tpu.memory_space<vmem>>, %arg11: memref<128x128xf32, #tpu.memory_space<vmem>>) attributes {dimension_semantics = [#tpu.dimension_semantics<parallel>, #tpu.dimension_semantics<parallel>, #tpu.dimension_semantics<arbitrary>], iteration_bounds = array<i64: 1, 1, 1>, scalar_prefetch = 0 : i64, scratch_operands = 1 : i64, tpu.core_type = #tpu.core_type<tc>, window_params = [{transform_indices = @transform_0, window_bounds = array<i64: 128, 128>}, {transform_indices = @transform_1, window_bounds = array<i64: 128, 128>}, {transform_indices = @transform_2, window_bounds = array<i64: 128, 128>}, {transform_indices = @transform_3, window_bounds = array<i64: 128, 128>}, {transform_indices = @transform_4, window_bounds = array<i64: 1, 128>}, {transform_indices = @transform_5, window_bounds = array<i64: 1, 128>}, {transform_indices = @transform_6, window_bounds = array<i64: 1, 128>}, {transform_indices = @transform_7, window_bounds = array<i64: 128, 128>}]} {
    %c0_i32 = arith.constant 0 : i32
    %0 = arith.cmpi eq, %arg2, %c0_i32 : i32
    %1 = arith.extui %0 : i1 to i32
    %c0_i32_0 = arith.constant 0 : i32
    %2 = arith.cmpi ne, %1, %c0_i32_0 : i32
    scf.if %2 {
      %cst_16 = arith.constant 0.000000e+00 : f32
      %32 = vector.broadcast %cst_16 : f32 to vector<128x128xf32>
      %c0_17 = arith.constant 0 : index
      %c0_18 = arith.constant 0 : index
      %33 = vector.load %arg11[%c0_17, %c0_18] : memref<128x128xf32, #tpu.memory_space<vmem>>, vector<128x128xf32>
      tpu.vector_store %arg11[%c0_17, %c0_18], %32 {strides = array<i32>} : memref<128x128xf32, #tpu.memory_space<vmem>>, vector<128x128xf32>,
    } else {
    }
    %c0 = arith.constant 0 : index
    %c0_1 = arith.constant 0 : index
    %3 = vector.load %arg5[%c0, %c0_1] : memref<128x128xf32, #tpu.memory_space<vmem>>, vector<128x128xf32>
    %cst = arith.constant 0.000000e+00 : f32
    %4 = vector.broadcast %cst : f32 to vector<128x128xf32>
    %5 = arith.maximumf %3, %4 : vector<128x128xf32>
    %6 = vector.broadcast %cst : f32 to vector<128x128xf32>
    %7 = arith.subf %3, %6 : vector<128x128xf32>
    %8 = arith.cmpf one, %7, %7 : vector<128x128xf32>
    %9 = vector.broadcast %cst : f32 to vector<128x128xf32>
    %10 = arith.addf %3, %9 : vector<128x128xf32>
    %11 = math.absf %7 : vector<128x128xf32>
    %cst_2 = arith.constant 0.000000e+00 : f32
    %12 = vector.broadcast %cst_2 : f32 to vector<128x128xf32>
    %13 = arith.subf %12, %11 : vector<128x128xf32>
    %14 = math.exp %13 : vector<128x128xf32>
    %15 = math.log1p %14 : vector<128x128xf32>
    %16 = arith.addf %5, %15 : vector<128x128xf32>
    %17 = arith.select %8, %10, %16 : vector<128x128xi1>, vector<128x128xf32>
    %c0_3 = arith.constant 0 : index
    %c0_4 = arith.constant 0 : index
    %18 = vector.load %arg4[%c0_3, %c0_4] : memref<128x128xf32, #tpu.memory_space<vmem>>, vector<128x128xf32>
    %c0_5 = arith.constant 0 : index
    %c0_6 = arith.constant 0 : index
    %19 = vector.load %arg6[%c0_5, %c0_6] : memref<128x128xf32, #tpu.memory_space<vmem>>, vector<128x128xf32>
    %20 = arith.mulf %17, %19 : vector<128x128xf32>
    %21 = arith.addf %18, %20 : vector<128x128xf32>
    %22 = arith.truncf %21 : vector<128x128xf32> to vector<128x128xbf16>
    %c0_7 = arith.constant 0 : index
    %c0_8 = arith.constant 0 : index
    %23 = vector.load %arg3[%c0_7, %c0_8] : memref<128x128xf32, #tpu.memory_space<vmem>>, vector<128x128xf32>
    %24 = arith.truncf %23 : vector<128x128xf32> to vector<128x128xbf16>
    %c0_9 = arith.constant 0 : index
    %c0_10 = arith.constant 0 : index
    %25 = vector.load %arg11[%c0_9, %c0_10] : memref<128x128xf32, #tpu.memory_space<vmem>>, vector<128x128xf32>
    %cst_11 = arith.constant dense<0.000000e+00> : vector<128x128xf32>
    %26 = tpu.matmul %24, %22, %cst_11 {dimension_numbers = #tpu.dot_dimension_numbers<[1], [1], [0], [0], [0, 0, 1, 0], [], []>} : vector<128x128xbf16>, vector<128x128xbf16>, vector<128x128xf32> -> vector<128x128xf32>
    %27 = arith.addf %25, %26 : vector<128x128xf32>
    %c0_12 = arith.constant 0 : index
    %c0_13 = arith.constant 0 : index
    %28 = vector.load %arg11[%c0_12, %c0_13] : memref<128x128xf32, #tpu.memory_space<vmem>>, vector<128x128xf32>
    tpu.vector_store %arg11[%c0_12, %c0_13], %27 {strides = array<i32>} : memref<128x128xf32, #tpu.memory_space<vmem>>, vector<128x128xf32>,
    %c0_i32_14 = arith.constant 0 : i32
    %29 = arith.cmpi eq, %arg2, %c0_i32_14 : i32
    %30 = arith.extui %29 : i1 to i32
    %c0_i32_15 = arith.constant 0 : i32
    %31 = arith.cmpi ne, %30, %c0_i32_15 : i32
    scf.if %31 {
      %c0_16 = arith.constant 0 : index
      %c0_17 = arith.constant 0 : index
      %32 = vector.load %arg8[%c0_16, %c0_17] : memref<1x128xf32, #tpu.memory_space<vmem>>, vector<1x128xf32>
      %cst_18 = arith.constant 0.000000e+00 : f32
      %33 = vector.broadcast %cst_18 : f32 to vector<1x128xf32>
      %34 = arith.maximumf %32, %33 : vector<1x128xf32>
      %35 = vector.broadcast %cst_18 : f32 to vector<1x128xf32>
      %36 = arith.subf %32, %35 : vector<1x128xf32>
      %37 = arith.cmpf one, %36, %36 : vector<1x128xf32>
      %38 = vector.broadcast %cst_18 : f32 to vector<1x128xf32>
      %39 = arith.addf %32, %38 : vector<1x128xf32>
      %40 = math.absf %36 : vector<1x128xf32>
      %cst_19 = arith.constant 0.000000e+00 : f32
      %41 = vector.broadcast %cst_19 : f32 to vector<1x128xf32>
      %42 = arith.subf %41, %40 : vector<1x128xf32>
      %43 = math.exp %42 : vector<1x128xf32>
      %44 = math.log1p %43 : vector<1x128xf32>
      %45 = arith.addf %34, %44 : vector<1x128xf32>
      %46 = arith.select %37, %39, %45 : vector<1x128xi1>, vector<1x128xf32>
      %c0_20 = arith.constant 0 : index
      %c0_21 = arith.constant 0 : index
      %47 = vector.load %arg7[%c0_20, %c0_21] : memref<1x128xf32, #tpu.memory_space<vmem>>, vector<1x128xf32>
      %c0_22 = arith.constant 0 : index
      %c0_23 = arith.constant 0 : index
      %48 = vector.load %arg9[%c0_22, %c0_23] : memref<1x128xf32, #tpu.memory_space<vmem>>, vector<1x128xf32>
      %49 = arith.mulf %46, %48 : vector<1x128xf32>
      %50 = arith.addf %47, %49 : vector<1x128xf32>
      %c0_24 = arith.constant 0 : index
      %c0_25 = arith.constant 0 : index
      %51 = vector.load %arg11[%c0_24, %c0_25] : memref<128x128xf32, #tpu.memory_space<vmem>>, vector<128x128xf32>
      %52 = vector.broadcast %50 : vector<1x128xf32> to vector<128x128xf32>
      %53 = arith.addf %51, %52 : vector<128x128xf32>
      %c0_26 = arith.constant 0 : index
      %c0_27 = arith.constant 0 : index
      %54 = vector.load %arg10[%c0_26, %c0_27] : memref<128x128xf32, #tpu.memory_space<vmem>>, vector<128x128xf32>
      tpu.vector_store %arg10[%c0_26, %c0_27], %53 {strides = array<i32>} : memref<128x128xf32, #tpu.memory_space<vmem>>, vector<128x128xf32>,
    } else {
    }
    return
  }
  func.func @transform_0(%arg0: i32, %arg1: i32, %arg2: i32) -> (i32, i32) {
    %c0_i32 = arith.constant 0 : i32
    return %arg0, %arg2 : i32, i32
  }
  func.func @transform_1(%arg0: i32, %arg1: i32, %arg2: i32) -> (i32, i32) {
    %c0_i32 = arith.constant 0 : i32
    return %arg1, %arg2 : i32, i32
  }
  func.func @transform_2(%arg0: i32, %arg1: i32, %arg2: i32) -> (i32, i32) {
    %c0_i32 = arith.constant 0 : i32
    return %arg1, %arg2 : i32, i32
  }
  func.func @transform_3(%arg0: i32, %arg1: i32, %arg2: i32) -> (i32, i32) {
    %c0_i32 = arith.constant 0 : i32
    return %arg1, %arg2 : i32, i32
  }
  func.func @transform_4(%arg0: i32, %arg1: i32, %arg2: i32) -> (i32, i32) {
    %c0_i32 = arith.constant 0 : i32
    %c0_i32_0 = arith.constant 0 : i32
    return %c0_i32, %arg1 : i32, i32
  }
  func.func @transform_5(%arg0: i32, %arg1: i32, %arg2: i32) -> (i32, i32) {
    %c0_i32 = arith.constant 0 : i32
    %c0_i32_0 = arith.constant 0 : i32
    return %c0_i32, %arg1 : i32, i32
  }
  func.func @transform_6(%arg0: i32, %arg1: i32, %arg2: i32) -> (i32, i32) {
    %c0_i32 = arith.constant 0 : i32
    %c0_i32_0 = arith.constant 0 : i32
    return %c0_i32, %arg1 : i32, i32
  }
  func.func @transform_7(%arg0: i32, %arg1: i32, %arg2: i32) -> (i32, i32) {
    %c0_i32 = arith.constant 0 : i32
    return %arg0, %arg1 : i32, i32
  }
}

</mosaic_0001>

<llo_original>
// kernel: tpu_custom_call.1
$region0: #{tpu_custom_call.1}
  #allocation0 [shape = 'u32[]', space=smem, size = 0x4, offset = 0x4, fixed_abs, tag = 'smem constant byte address 0x4 - core index']
  #allocation1 [shape = 'u32[144,128]{1,0:T(1,128)}', space=vmem, size = 0x12000, scoped, tag = 'internal scratch']
  #allocation2 [shape = 'f32[128,128]{1,0:T(8,128)}', space=vmem, size = 0x10000, scoped, tag = 'scratch operand']
  %s0 = inlined_call_operand.hbm [shape: f32[128,128], index: 0, kind: input, shape index: {}]
  %s1 = inlined_call_operand.hbm [shape: f32[128,128], index: 1, kind: input, shape index: {}]
  %s2 = inlined_call_operand.hbm [shape: f32[128,128], index: 2, kind: input, shape index: {}]
  %s3 = inlined_call_operand.hbm [shape: f32[128,128], index: 3, kind: input, shape index: {}]
  %s4 = inlined_call_operand.vmem [shape: f32[1,128], index: 4, kind: input, shape index: {}]
  %s5 = inlined_call_operand.vmem [shape: f32[1,128], index: 5, kind: input, shape index: {}]
  %s6 = inlined_call_operand.vmem [shape: f32[1,128], index: 6, kind: input, shape index: {}]
  %s7 = inlined_call_operand.hbm [shape: f32[128,128], index: 7, kind: output, shape index: {}]
  %s8 = sld [smem:[#allocation0]]
  $region62: #{tpu_custom_call.1} parent=0
    _
  %s10 = ssub.s32 1, %s8
  %s11 = scalar_select 0, %s10, %s8
  $region1: #{tpu_custom_call.1} parent=0
    #allocation3 [shape = 'u8[65536]{0}', space=vmem, size = 0x10000, scoped, tag = 'input window, operand 0, single buffered']
    #allocation4 [shape = 's32[1]{0}', space=sflag, size = 0x4, scoped, tag = 'scoped memory for tpu_custom_call.1']
    #allocation5 [shape = 's32[1]{0}', space=sflag, size = 0x4, scoped, tag = 'scoped memory for tpu_custom_call.1']
    #allocation6 [shape = 'u8[65536]{0}', space=vmem, size = 0x10000, scoped, tag = 'input window, operand 1, single buffered']
    #allocation7 [shape = 's32[1]{0}', space=sflag, size = 0x4, scoped, tag = 'scoped memory for tpu_custom_call.1']
    #allocation8 [shape = 'u8[65536]{0}', space=vmem, size = 0x10000, scoped, tag = 'input window, operand 2, single buffered']
    #allocation9 [shape = 'u8[65536]{0}', space=vmem, size = 0x10000, scoped, tag = 'input window, operand 3, single buffered']
    #allocation10 [shape = 's32[1]{0}', space=sflag, size = 0x4, scoped, tag = 'scoped memory for tpu_custom_call.1']
    #allocation11 [shape = 'u8[65536]{0}', space=vmem, size = 0x10000, scoped, tag = 'output window, operand 0, single buffered']
    %12 = vsyncpa [#allocation4], 0
    %13 = vsyncpa [#allocation7], 0
    %14 = vsyncpa [#allocation10], 0
    %15 = vsyncpa [#allocation5], 0
    // Predicated region
    $region2: #{tpu_custom_call.1} parent=1 // pred_check
      _
    $region3: #{tpu_custom_call.1} parent=1 // pred_check_branch
      %17 = sbr.rel (0) target = $region5
    $region4: #{tpu_custom_call.1} parent=1 // pred_region
      %s19 = ssub.s32 2048, 2048
      %20 = vsyncadd [#allocation4], %s19
      %s21 = sshll.u32 [#allocation3], 4
      %s22 = int_to_ptr.vmem [resolvable:$true] %s21
      %27 = dma.hbm_to_vmem [thread:$0]  %s0, 2048, %s22, [#allocation4], 128, 128, 8
    $region5: #{tpu_custom_call.1} parent=1 // pred_fallthru
      _
    // Predicated region
    $region6: #{tpu_custom_call.1} parent=1 // pred_check
      _
    $region7: #{tpu_custom_call.1} parent=1 // pred_check_branch
      %29 = sbr.rel (0) target = $region9
    $region8: #{tpu_custom_call.1} parent=1 // pred_region
      %s31 = ssub.s32 2048, 2048
      %32 = vsyncadd [#allocation7], %s31
      %s33 = sshll.u32 [#allocation6], 4
      %s34 = int_to_ptr.vmem [resolvable:$true] %s33
      %39 = dma.hbm_to_vmem [thread:$0]  %s1, 2048, %s34, [#allocation7], 128, 128, 8
    $region9: #{tpu_custom_call.1} parent=1 // pred_fallthru
      _
    // Predicated region
    $region10: #{tpu_custom_call.1} parent=1 // pred_check
      _
    $region11: #{tpu_custom_call.1} parent=1 // pred_check_branch
      %41 = sbr.rel (0) target = $region13
    $region12: #{tpu_custom_call.1} parent=1 // pred_region
      %s43 = ssub.s32 2048, 2048
      %44 = vsyncadd [#allocation7], %s43
      %s45 = sshll.u32 [#allocation8], 4
      %s46 = int_to_ptr.vmem [resolvable:$true] %s45
      %51 = dma.hbm_to_vmem [thread:$0]  %s2, 2048, %s46, [#allocation7], 128, 128, 8
    $region13: #{tpu_custom_call.1} parent=1 // pred_fallthru
      _
    // Predicated region
    $region14: #{tpu_custom_call.1} parent=1 // pred_check
      _
    $region15: #{tpu_custom_call.1} parent=1 // pred_check_branch
      %53 = sbr.rel (0) target = $region17
    $region16: #{tpu_custom_call.1} parent=1 // pred_region
      %s55 = ssub.s32 2048, 2048
      %56 = vsyncadd [#allocation10], %s55
      %s57 = sshll.u32 [#allocation9], 4
      %s58 = int_to_ptr.vmem [resolvable:$true] %s57
      %63 = dma.hbm_to_vmem [thread:$0]  %s3, 2048, %s58, [#allocation10], 128, 128, 8
    $region17: #{tpu_custom_call.1} parent=1 // pred_fallthru
      _
    // Predicated region
    $region18: #{tpu_custom_call.1} parent=1 // pred_check
      _
    $region19: #{tpu_custom_call.1} parent=1 // pred_check_branch
      %65 = sbr.rel (0) target = $region21
    $region20: #{tpu_custom_call.1} parent=1 // pred_region
      _
    $region21: #{tpu_custom_call.1} parent=1 // pred_fallthru
      _
    // Predicated region
    $region22: #{tpu_custom_call.1} parent=1 // pred_check
      _
    $region23: #{tpu_custom_call.1} parent=1 // pred_check_branch
      %67 = sbr.rel (0) target = $region25
    $region24: #{tpu_custom_call.1} parent=1 // pred_region
      _
    $region25: #{tpu_custom_call.1} parent=1 // pred_fallthru
      _
    // Predicated region
    $region26: #{tpu_custom_call.1} parent=1 // pred_check
      _
    $region27: #{tpu_custom_call.1} parent=1 // pred_check_branch
      %69 = sbr.rel (0) target = $region29
    $region28: #{tpu_custom_call.1} parent=1 // pred_region
      _
    $region29: #{tpu_custom_call.1} parent=1 // pred_fallthru
      _
    // Predicated region
    $region30: #{tpu_custom_call.1} parent=1 // pred_check
      _
    $region31: #{tpu_custom_call.1} parent=1 // pred_check_branch
      %71 = sbr.rel (0) target = $region33
    $region32: #{tpu_custom_call.1} parent=1 // pred_region
      %72 = dma.done [#allocation4], 2048
    $region33: #{tpu_custom_call.1} parent=1 // pred_fallthru
      _
    // Predicated region
    $region34: #{tpu_custom_call.1} parent=1 // pred_check
      _
    $region35: #{tpu_custom_call.1} parent=1 // pred_check_branch
      %74 = sbr.rel (0) target = $region37
    $region36: #{tpu_custom_call.1} parent=1 // pred_region
      %75 = dma.done [#allocation7], 2048
    $region37: #{tpu_custom_call.1} parent=1 // pred_fallthru
      _
    // Predicated region
    $region38: #{tpu_custom_call.1} parent=1 // pred_check
      _
    $region39: #{tpu_custom_call.1} parent=1 // pred_check_branch
      %77 = sbr.rel (0) target = $region41
    $region40: #{tpu_custom_call.1} parent=1 // pred_region
      %78 = dma.done [#allocation7], 2048
    $region41: #{tpu_custom_call.1} parent=1 // pred_fallthru
      _
    // Predicated region
    $region42: #{tpu_custom_call.1} parent=1 // pred_check
      _
    $region43: #{tpu_custom_call.1} parent=1 // pred_check_branch
      %80 = sbr.rel (0) target = $region45
    $region44: #{tpu_custom_call.1} parent=1 // pred_region
      %81 = dma.done [#allocation10], 2048
    $region45: #{tpu_custom_call.1} parent=1 // pred_fallthru
      _
    %p83 = scmp.eq.s32.totalorder 0, 0
    // Predicated region
    $region46: #{tpu_custom_call.1} parent=1 // pred_check
      %p84 = pneg %p83
    $region47: #{tpu_custom_call.1} parent=1 // pred_check_branch
      %86 = sbr.rel (%p84) target = $region49
    $region48: #{tpu_custom_call.1} parent=1 // pred_region
      %87 = vst [vmem:[#allocation2] sm:$0xff] 0.0
      %88 = vst [vmem:[#allocation2 + $0x8] sm:$0xff] 0.0
      %89 = vst [vmem:[#allocation2 + $0x10] sm:$0xff] 0.0
      %90 = vst [vmem:[#allocation2 + $0x18] sm:$0xff] 0.0
      %91 = vst [vmem:[#allocation2 + $0x20] sm:$0xff] 0.0
      %92 = vst [vmem:[#allocation2 + $0x28] sm:$0xff] 0.0
      %93 = vst [vmem:[#allocation2 + $0x30] sm:$0xff] 0.0
      %94 = vst [vmem:[#allocation2 + $0x38] sm:$0xff] 0.0
      %95 = vst [vmem:[#allocation2 + $0x40] sm:$0xff] 0.0
      %96 = vst [vmem:[#allocation2 + $0x48] sm:$0xff] 0.0
      %97 = vst [vmem:[#allocation2 + $0x50] sm:$0xff] 0.0
      %98 = vst [vmem:[#allocation2 + $0x58] sm:$0xff] 0.0
      %99 = vst [vmem:[#allocation2 + $0x60] sm:$0xff] 0.0
      %100 = vst [vmem:[#allocation2 + $0x68] sm:$0xff] 0.0
      %101 = vst [vmem:[#allocation2 + $0x70] sm:$0xff] 0.0
      %102 = vst [vmem:[#allocation2 + $0x78] sm:$0xff] 0.0
    $region49: #{tpu_custom_call.1} parent=1 // pred_fallthru
      _
    %v103 = vld [vmem:[#allocation8] sm:$0xff]
    %v104 = vld [vmem:[#allocation8 + $0x8] sm:$0xff]
    %v105 = vld [vmem:[#allocation8 + $0x10] sm:$0xff]
    %v106 = vld [vmem:[#allocation8 + $0x18] sm:$0xff]
    %v107 = vld [vmem:[#allocation8 + $0x20] sm:$0xff]
    %v108 = vld [vmem:[#allocation8 + $0x28] sm:$0xff]
    %v109 = vld [vmem:[#allocation8 + $0x30] sm:$0xff]
    %v110 = vld [vmem:[#allocation8 + $0x38] sm:$0xff]
    %v111 = vld [vmem:[#allocation8 + $0x40] sm:$0xff]
    %v112 = vld [vmem:[#allocation8 + $0x48] sm:$0xff]
    %v113 = vld [vmem:[#allocation8 + $0x50] sm:$0xff]
    %v114 = vld [vmem:[#allocation8 + $0x58] sm:$0xff]
    %v115 = vld [vmem:[#allocation8 + $0x60] sm:$0xff]
    %v116 = vld [vmem:[#allocation8 + $0x68] sm:$0xff]
    %v117 = vld [vmem:[#allocation8 + $0x70] sm:$0xff]
    %v118 = vld [vmem:[#allocation8 + $0x78] sm:$0xff]
    %v119 = vmax.f32 %v103, 0.0
    %v120 = vmax.f32 %v104, 0.0
    %v121 = vmax.f32 %v105, 0.0
    %v122 = vmax.f32 %v106, 0.0
    %v123 = vmax.f32 %v107, 0.0
    %v124 = vmax.f32 %v108, 0.0
    %v125 = vmax.f32 %v109, 0.0
    %v126 = vmax.f32 %v110, 0.0
    %v127 = vmax.f32 %v111, 0.0
    %v128 = vmax.f32 %v112, 0.0
    %v129 = vmax.f32 %v113, 0.0
    %v130 = vmax.f32 %v114, 0.0
    %v131 = vmax.f32 %v115, 0.0
    %v132 = vmax.f32 %v116, 0.0
    %v133 = vmax.f32 %v117, 0.0
    %v134 = vmax.f32 %v118, 0.0
    %vm135 = vcmp.ne.f32.partialorder %v103, %v103
    %vm136 = vcmp.ne.f32.partialorder %v104, %v104
    %vm137 = vcmp.ne.f32.partialorder %v105, %v105
    %vm138 = vcmp.ne.f32.partialorder %v106, %v106
    %vm139 = vcmp.ne.f32.partialorder %v107, %v107
    %vm140 = vcmp.ne.f32.partialorder %v108, %v108
    %vm141 = vcmp.ne.f32.partialorder %v109, %v109
    %vm142 = vcmp.ne.f32.partialorder %v110, %v110
    %vm143 = vcmp.ne.f32.partialorder %v111, %v111
    %vm144 = vcmp.ne.f32.partialorder %v112, %v112
    %vm145 = vcmp.ne.f32.partialorder %v113, %v113
    %vm146 = vcmp.ne.f32.partialorder %v114, %v114
    %vm147 = vcmp.ne.f32.partialorder %v115, %v115
    %vm148 = vcmp.ne.f32.partialorder %v116, %v116
    %vm149 = vcmp.ne.f32.partialorder %v117, %v117
    %vm150 = vcmp.ne.f32.partialorder %v118, %v118
    %v151 = vadd.f32 %v103, 0.0
    %v152 = vadd.f32 %v104, 0.0
    %v153 = vadd.f32 %v105, 0.0
    %v154 = vadd.f32 %v106, 0.0
    %v155 = vadd.f32 %v107, 0.0
    %v156 = vadd.f32 %v108, 0.0
    %v157 = vadd.f32 %v109, 0.0
    %v158 = vadd.f32 %v110, 0.0
    %v159 = vadd.f32 %v111, 0.0
    %v160 = vadd.f32 %v112, 0.0
    %v161 = vadd.f32 %v113, 0.0
    %v162 = vadd.f32 %v114, 0.0
    %v163 = vadd.f32 %v115, 0.0
    %v164 = vadd.f32 %v116, 0.0
    %v165 = vadd.f32 %v117, 0.0
    %v166 = vadd.f32 %v118, 0.0
    %v167 = vand.u32 2147483647, %v103
    %v168 = vand.u32 2147483647, %v104
    %v169 = vand.u32 2147483647, %v105
    %v170 = vand.u32 2147483647, %v106
    %v171 = vand.u32 2147483647, %v107
    %v172 = vand.u32 2147483647, %v108
    %v173 = vand.u32 2147483647, %v109
    %v174 = vand.u32 2147483647, %v110
    %v175 = vand.u32 2147483647, %v111
    %v176 = vand.u32 2147483647, %v112
    %v177 = vand.u32 2147483647, %v113
    %v178 = vand.u32 2147483647, %v114
    %v179 = vand.u32 2147483647, %v115
    %v180 = vand.u32 2147483647, %v116
    %v181 = vand.u32 2147483647, %v117
    %v182 = vand.u32 2147483647, %v118
    %v183 = vsub.f32 0.0, %v167
    %v184 = vsub.f32 0.0, %v168
    %v185 = vsub.f32 0.0, %v169
    %v186 = vsub.f32 0.0, %v170
    %v187 = vsub.f32 0.0, %v171
    %v188 = vsub.f32 0.0, %v172
    %v189 = vsub.f32 0.0, %v173
    %v190 = vsub.f32 0.0, %v174
    %v191 = vsub.f32 0.0, %v175
    %v192 = vsub.f32 0.0, %v176
    %v193 = vsub.f32 0.0, %v177
    %v194 = vsub.f32 0.0, %v178
    %v195 = vsub.f32 0.0, %v179
    %v196 = vsub.f32 0.0, %v180
    %v197 = vsub.f32 0.0, %v181
    %v198 = vsub.f32 0.0, %v182
    %v199 = vmul.f32 %v183, 1.442695
    %v200 = vpow.pop %v199
    %v201 = vmul.f32 %v184, 1.442695
    %v202 = vpow.pop %v201
    %v203 = vmul.f32 %v185, 1.442695
    %v204 = vpow.pop %v203
    %v205 = vmul.f32 %v186, 1.442695
    %v206 = vpow.pop %v205
    %v207 = vmul.f32 %v187, 1.442695
    %v208 = vpow.pop %v207
    %v209 = vmul.f32 %v188, 1.442695
    %v210 = vpow.pop %v209
    %v211 = vmul.f32 %v189, 1.442695
    %v212 = vpow.pop %v211
    %v213 = vmul.f32 %v190, 1.442695
    %v214 = vpow.pop %v213
    %v215 = vmul.f32 %v191, 1.442695
    %v216 = vpow.pop %v215
    %v217 = vmul.f32 %v192, 1.442695
    %v218 = vpow.pop %v217
    %v219 = vmul.f32 %v193, 1.442695
    %v220 = vpow.pop %v219
    %v221 = vmul.f32 %v194, 1.442695
    %v222 = vpow.pop %v221
    %v223 = vmul.f32 %v195, 1.442695
    %v224 = vpow.pop %v223
    %v225 = vmul.f32 %v196, 1.442695
    %v226 = vpow.pop %v225
    %v227 = vmul.f32 %v197, 1.442695
    %v228 = vpow.pop %v227
    %v229 = vmul.f32 %v198, 1.442695
    %v230 = vpow.pop %v229
    %v231 = vadd.f32 %v200, 1.0
    %v232 = vlog2.pop %v231
    %v233 = vmul.f32 %v232, 0.6931472
    %v234 = vmul.f32 -0.5, %v200
    %v235 = vadd.f32 %v234, 1.0
    %v236 = vmul.f32 %v235, %v200
    %v237 = vand.u32 2147483647, %v200
    %vm238 = vcmp.lt.f32.partialorder %v237, 0.0004427343
    %v239 = vsel %vm238, %v236, %v233
    %v240 = vadd.f32 %v202, 1.0
    %v241 = vlog2.pop %v240
    %v242 = vmul.f32 %v241, 0.6931472
    %v243 = vmul.f32 -0.5, %v202
    %v244 = vadd.f32 %v243, 1.0
    %v245 = vmul.f32 %v244, %v202
    %v246 = vand.u32 2147483647, %v202
    %vm247 = vcmp.lt.f32.partialorder %v246, 0.0004427343
    %v248 = vsel %vm247, %v245, %v242
    %v249 = vadd.f32 %v204, 1.0
    %v250 = vlog2.pop %v249
    %v251 = vmul.f32 %v250, 0.6931472
    %v252 = vmul.f32 -0.5, %v204
    %v253 = vadd.f32 %v252, 1.0
    %v254 = vmul.f32 %v253, %v204
    %v255 = vand.u32 2147483647, %v204
    %vm256 = vcmp.lt.f32.partialorder %v255, 0.0004427343
    %v257 = vsel %vm256, %v254, %v251
    %v258 = vadd.f32 %v206, 1.0
    %v259 = vlog2.pop %v258
    %v260 = vmul.f32 %v259, 0.6931472
    %v261 = vmul.f32 -0.5, %v206
    %v262 = vadd.f32 %v261, 1.0
    %v263 = vmul.f32 %v262, %v206
    %v264 = vand.u32 2147483647, %v206
    %vm265 = vcmp.lt.f32.partialorder %v264, 0.0004427343
    %v266 = vsel %vm265, %v263, %v260
    %v267 = vadd.f32 %v208, 1.0
    %v268 = vlog2.pop %v267
    %v269 = vmul.f32 %v268, 0.6931472
    %v270 = vmul.f32 -0.5, %v208
    %v271 = vadd.f32 %v270, 1.0
    %v272 = vmul.f32 %v271, %v208
    %v273 = vand.u32 2147483647, %v208
    %vm274 = vcmp.lt.f32.partialorder %v273, 0.0004427343
    %v275 = vsel %vm274, %v272, %v269
    %v276 = vadd.f32 %v210, 1.0
    %v277 = vlog2.pop %v276
    %v278 = vmul.f32 %v277, 0.6931472
    %v279 = vmul.f32 -0.5, %v210
    %v280 = vadd.f32 %v279, 1.0
    %v281 = vmul.f32 %v280, %v210
    %v282 = vand.u32 2147483647, %v210
    %vm283 = vcmp.lt.f32.partialorder %v282, 0.0004427343
    %v284 = vsel %vm283, %v281, %v278
    %v285 = vadd.f32 %v212, 1.0
    %v286 = vlog2.pop %v285
    %v287 = vmul.f32 %v286, 0.6931472
    %v288 = vmul.f32 -0.5, %v212
    %v289 = vadd.f32 %v288, 1.0
    %v290 = vmul.f32 %v289, %v212
    %v291 = vand.u32 2147483647, %v212
    %vm292 = vcmp.lt.f32.partialorder %v291, 0.0004427343
    %v293 = vsel %vm292, %v290, %v287
    %v294 = vadd.f32 %v214, 1.0
    %v295 = vlog2.pop %v294
    %v296 = vmul.f32 %v295, 0.6931472
    %v297 = vmul.f32 -0.5, %v214
    %v298 = vadd.f32 %v297, 1.0
    %v299 = vmul.f32 %v298, %v214
    %v300 = vand.u32 2147483647, %v214
    %vm301 = vcmp.lt.f32.partialorder %v300, 0.0004427343
    %v302 = vsel %vm301, %v299, %v296
    %v303 = vadd.f32 %v216, 1.0
    %v304 = vlog2.pop %v303
    %v305 = vmul.f32 %v304, 0.6931472
    %v306 = vmul.f32 -0.5, %v216
    %v307 = vadd.f32 %v306, 1.0
    %v308 = vmul.f32 %v307, %v216
    %v309 = vand.u32 2147483647, %v216
    %vm310 = vcmp.lt.f32.partialorder %v309, 0.0004427343
    %v311 = vsel %vm310, %v308, %v305
    %v312 = vadd.f32 %v218, 1.0
    %v313 = vlog2.pop %v312
    %v314 = vmul.f32 %v313, 0.6931472
    %v315 = vmul.f32 -0.5, %v218
    %v316 = vadd.f32 %v315, 1.0
    %v317 = vmul.f32 %v316, %v218
    %v318 = vand.u32 2147483647, %v218
    %vm319 = vcmp.lt.f32.partialorder %v318, 0.0004427343
    %v320 = vsel %vm319, %v317, %v314
    %v321 = vadd.f32 %v220, 1.0
    %v322 = vlog2.pop %v321
    %v323 = vmul.f32 %v322, 0.6931472
    %v324 = vmul.f32 -0.5, %v220
    %v325 = vadd.f32 %v324, 1.0
    %v326 = vmul.f32 %v325, %v220
    %v327 = vand.u32 2147483647, %v220
    %vm328 = vcmp.lt.f32.partialorder %v327, 0.0004427343
    %v329 = vsel %vm328, %v326, %v323
    %v330 = vadd.f32 %v222, 1.0
    %v331 = vlog2.pop %v330
    %v332 = vmul.f32 %v331, 0.6931472
    %v333 = vmul.f32 -0.5, %v222
    %v334 = vadd.f32 %v333, 1.0
    %v335 = vmul.f32 %v334, %v222
    %v336 = vand.u32 2147483647, %v222
    %vm337 = vcmp.lt.f32.partialorder %v336, 0.0004427343
    %v338 = vsel %vm337, %v335, %v332
    %v339 = vadd.f32 %v224, 1.0
    %v340 = vlog2.pop %v339
    %v341 = vmul.f32 %v340, 0.6931472
    %v342 = vmul.f32 -0.5, %v224
    %v343 = vadd.f32 %v342, 1.0
    %v344 = vmul.f32 %v343, %v224
    %v345 = vand.u32 2147483647, %v224
    %vm346 = vcmp.lt.f32.partialorder %v345, 0.0004427343
    %v347 = vsel %vm346, %v344, %v341
    %v348 = vadd.f32 %v226, 1.0
    %v349 = vlog2.pop %v348
    %v350 = vmul.f32 %v349, 0.6931472
    %v351 = vmul.f32 -0.5, %v226
    %v352 = vadd.f32 %v351, 1.0
    %v353 = vmul.f32 %v352, %v226
    %v354 = vand.u32 2147483647, %v226
    %vm355 = vcmp.lt.f32.partialorder %v354, 0.0004427343
    %v356 = vsel %vm355, %v353, %v350
    %v357 = vadd.f32 %v228, 1.0
    %v358 = vlog2.pop %v357
    %v359 = vmul.f32 %v358, 0.6931472
    %v360 = vmul.f32 -0.5, %v228
    %v361 = vadd.f32 %v360, 1.0
    %v362 = vmul.f32 %v361, %v228
    %v363 = vand.u32 2147483647, %v228
    %vm364 = vcmp.lt.f32.partialorder %v363, 0.0004427343
    %v365 = vsel %vm364, %v362, %v359
    %v366 = vadd.f32 %v230, 1.0
    %v367 = vlog2.pop %v366
    %v368 = vmul.f32 %v367, 0.6931472
    %v369 = vmul.f32 -0.5, %v230
    %v370 = vadd.f32 %v369, 1.0
    %v371 = vmul.f32 %v370, %v230
    %v372 = vand.u32 2147483647, %v230
    %vm373 = vcmp.lt.f32.partialorder %v372, 0.0004427343
    %v374 = vsel %vm373, %v371, %v368
    %v375 = vadd.f32 %v119, %v239
    %v376 = vadd.f32 %v120, %v248
    %v377 = vadd.f32 %v121, %v257
    %v378 = vadd.f32 %v122, %v266
    %v379 = vadd.f32 %v123, %v275
    %v380 = vadd.f32 %v124, %v284
    %v381 = vadd.f32 %v125, %v293
    %v382 = vadd.f32 %v126, %v302
    %v383 = vadd.f32 %v127, %v311
    %v384 = vadd.f32 %v128, %v320
    %v385 = vadd.f32 %v129, %v329
    %v386 = vadd.f32 %v130, %v338
    %v387 = vadd.f32 %v131, %v347
    %v388 = vadd.f32 %v132, %v356
    %v389 = vadd.f32 %v133, %v365
    %v390 = vadd.f32 %v134, %v374
    %v391 = vsel %vm135, %v151, %v375
    %v392 = vsel %vm136, %v152, %v376
    %v393 = vsel %vm137, %v153, %v377
    %v394 = vsel %vm138, %v154, %v378
    %v395 = vsel %vm139, %v155, %v379
    %v396 = vsel %vm140, %v156, %v380
    %v397 = vsel %vm141, %v157, %v381
    %v398 = vsel %vm142, %v158, %v382
    %v399 = vsel %vm143, %v159, %v383
    %v400 = vsel %vm144, %v160, %v384
    %v401 = vsel %vm145, %v161, %v385
    %v402 = vsel %vm146, %v162, %v386
    %v403 = vsel %vm147, %v163, %v387
    %v404 = vsel %vm148, %v164, %v388
    %v405 = vsel %vm149, %v165, %v389
    %v406 = vsel %vm150, %v166, %v390
    %v407 = vld [vmem:[#allocation6] sm:$0xff]
    %v408 = vld [vmem:[#allocation6 + $0x8] sm:$0xff]
    %v409 = vld [vmem:[#allocation6 + $0x10] sm:$0xff]
    %v410 = vld [vmem:[#allocation6 + $0x18] sm:$0xff]
    %v411 = vld [vmem:[#allocation6 + $0x20] sm:$0xff]
    %v412 = vld [vmem:[#allocation6 + $0x28] sm:$0xff]
    %v413 = vld [vmem:[#allocation6 + $0x30] sm:$0xff]
    %v414 = vld [vmem:[#allocation6 + $0x38] sm:$0xff]
    %v415 = vld [vmem:[#allocation6 + $0x40] sm:$0xff]
    %v416 = vld [vmem:[#allocation6 + $0x48] sm:$0xff]
    %v417 = vld [vmem:[#allocation6 + $0x50] sm:$0xff]
    %v418 = vld [vmem:[#allocation6 + $0x58] sm:$0xff]
    %v419 = vld [vmem:[#allocation6 + $0x60] sm:$0xff]
    %v420 = vld [vmem:[#allocation6 + $0x68] sm:$0xff]
    %v421 = vld [vmem:[#allocation6 + $0x70] sm:$0xff]
    %v422 = vld [vmem:[#allocation6 + $0x78] sm:$0xff]
    %v423 = vld [vmem:[#allocation9] sm:$0xff]
    %v424 = vld [vmem:[#allocation9 + $0x8] sm:$0xff]
    %v425 = vld [vmem:[#allocation9 + $0x10] sm:$0xff]
    %v426 = vld [vmem:[#allocation9 + $0x18] sm:$0xff]
    %v427 = vld [vmem:[#allocation9 + $0x20] sm:$0xff]
    %v428 = vld [vmem:[#allocation9 + $0x28] sm:$0xff]
    %v429 = vld [vmem:[#allocation9 + $0x30] sm:$0xff]
    %v430 = vld [vmem:[#allocation9 + $0x38] sm:$0xff]
    %v431 = vld [vmem:[#allocation9 + $0x40] sm:$0xff]
    %v432 = vld [vmem:[#allocation9 + $0x48] sm:$0xff]
    %v433 = vld [vmem:[#allocation9 + $0x50] sm:$0xff]
    %v434 = vld [vmem:[#allocation9 + $0x58] sm:$0xff]
    %v435 = vld [vmem:[#allocation9 + $0x60] sm:$0xff]
    %v436 = vld [vmem:[#allocation9 + $0x68] sm:$0xff]
    %v437 = vld [vmem:[#allocation9 + $0x70] sm:$0xff]
    %v438 = vld [vmem:[#allocation9 + $0x78] sm:$0xff]
    %v439 = vmul.f32 %v391, %v423
    %v440 = vmul.f32 %v392, %v424
    %v441 = vmul.f32 %v393, %v425
    %v442 = vmul.f32 %v394, %v426
    %v443 = vmul.f32 %v395, %v427
    %v444 = vmul.f32 %v396, %v428
    %v445 = vmul.f32 %v397, %v429
    %v446 = vmul.f32 %v398, %v430
    %v447 = vmul.f32 %v399, %v431
    %v448 = vmul.f32 %v400, %v432
    %v449 = vmul.f32 %v401, %v433
    %v450 = vmul.f32 %v402, %v434
    %v451 = vmul.f32 %v403, %v435
    %v452 = vmul.f32 %v404, %v436
    %v453 = vmul.f32 %v405, %v437
    %v454 = vmul.f32 %v406, %v438
    %v455 = vadd.f32 %v407, %v439
    %v456 = vadd.f32 %v408, %v440
    %v457 = vadd.f32 %v409, %v441
    %v458 = vadd.f32 %v410, %v442
    %v459 = vadd.f32 %v411, %v443
    %v460 = vadd.f32 %v412, %v444
    %v461 = vadd.f32 %v413, %v445
    %v462 = vadd.f32 %v414, %v446
    %v463 = vadd.f32 %v415, %v447
    %v464 = vadd.f32 %v416, %v448
    %v465 = vadd.f32 %v417, %v449
    %v466 = vadd.f32 %v418, %v450
    %v467 = vadd.f32 %v419, %v451
    %v468 = vadd.f32 %v420, %v452
    %v469 = vadd.f32 %v421, %v453
    %v470 = vadd.f32 %v422, %v454
    %v471 = vpack.c.bf16 %v456, %v455
    %v472 = vpack.c.bf16 %v458, %v457
    %v473 = vpack.c.bf16 %v460, %v459
    %v474 = vpack.c.bf16 %v462, %v461
    %v475 = vpack.c.bf16 %v464, %v463
    %v476 = vpack.c.bf16 %v466, %v465
    %v477 = vpack.c.bf16 %v468, %v467
    %v478 = vpack.c.bf16 %v470, %v469
    %v479 = vld [vmem:[#allocation3] sm:$0xff]
    %v480 = vld [vmem:[#allocation3 + $0x8] sm:$0xff]
    %v481 = vld [vmem:[#allocation3 + $0x10] sm:$0xff]
    %v482 = vld [vmem:[#allocation3 + $0x18] sm:$0xff]
    %v483 = vld [vmem:[#allocation3 + $0x20] sm:$0xff]
    %v484 = vld [vmem:[#allocation3 + $0x28] sm:$0xff]
    %v485 = vld [vmem:[#allocation3 + $0x30] sm:$0xff]
    %v486 = vld [vmem:[#allocation3 + $0x38] sm:$0xff]
    %v487 = vld [vmem:[#allocation3 + $0x40] sm:$0xff]
    %v488 = vld [vmem:[#allocation3 + $0x48] sm:$0xff]
    %v489 = vld [vmem:[#allocation3 + $0x50] sm:$0xff]
    %v490 = vld [vmem:[#allocation3 + $0x58] sm:$0xff]
    %v491 = vld [vmem:[#allocation3 + $0x60] sm:$0xff]
    %v492 = vld [vmem:[#allocation3 + $0x68] sm:$0xff]
    %v493 = vld [vmem:[#allocation3 + $0x70] sm:$0xff]
    %v494 = vld [vmem:[#allocation3 + $0x78] sm:$0xff]
    %v495 = vpack.c.bf16 %v480, %v479
    %v496 = vpack.c.bf16 %v482, %v481
    %v497 = vpack.c.bf16 %v484, %v483
    %v498 = vpack.c.bf16 %v486, %v485
    %v499 = vpack.c.bf16 %v488, %v487
    %v500 = vpack.c.bf16 %v490, %v489
    %v501 = vpack.c.bf16 %v492, %v491
    %v502 = vpack.c.bf16 %v494, %v493
    %v503 = vld [vmem:[#allocation2] sm:$0xff]
    %v504 = vld [vmem:[#allocation2 + $0x8] sm:$0xff]
    %v505 = vld [vmem:[#allocation2 + $0x10] sm:$0xff]
    %v506 = vld [vmem:[#allocation2 + $0x18] sm:$0xff]
    %v507 = vld [vmem:[#allocation2 + $0x20] sm:$0xff]
    %v508 = vld [vmem:[#allocation2 + $0x28] sm:$0xff]
    %v509 = vld [vmem:[#allocation2 + $0x30] sm:$0xff]
    %v510 = vld [vmem:[#allocation2 + $0x38] sm:$0xff]
    %v511 = vld [vmem:[#allocation2 + $0x40] sm:$0xff]
    %v512 = vld [vmem:[#allocation2 + $0x48] sm:$0xff]
    %v513 = vld [vmem:[#allocation2 + $0x50] sm:$0xff]
    %v514 = vld [vmem:[#allocation2 + $0x58] sm:$0xff]
    %v515 = vld [vmem:[#allocation2 + $0x60] sm:$0xff]
    %v516 = vld [vmem:[#allocation2 + $0x68] sm:$0xff]
    %v517 = vld [vmem:[#allocation2 + $0x70] sm:$0xff]
    %v518 = vld [vmem:[#allocation2 + $0x78] sm:$0xff]
    %519 = vmatprep.subr.bf16.mxu0 0
    %520 = vmatpush1.bf16.xpose.msra.mxu0 %v478
    %521 = vmatprep.subr.bf16.mxu0 0
    %522 = vmatpush1.bf16.xpose.msra.mxu0 %v477
    %523 = vmatprep.subr.bf16.mxu0 0
    %524 = vmatpush1.bf16.xpose.msra.mxu0 %v476
    %525 = vmatprep.subr.bf16.mxu0 0
    %526 = vmatpush1.bf16.xpose.msra.mxu0 %v475
    %527 = vmatprep.subr.bf16.mxu0 0
    %528 = vmatpush1.bf16.xpose.msra.mxu0 %v474
    %529 = vmatprep.subr.bf16.mxu0 0
    %530 = vmatpush1.bf16.xpose.msra.mxu0 %v473
    %531 = vmatprep.subr.bf16.mxu0 0
    %532 = vmatpush1.bf16.xpose.msra.mxu0 %v472
    %533 = vmatprep.subr.bf16.mxu0 0
    %534 = vmatpush1.bf16.xpose.msra.mxu0 %v471
    %535 = vmatprep.subr.bf16.mxu0 0
    %536 = vmatpush2.bf16.xpose.msra.mxu0 0
    %537 = vmatprep.subr.bf16.mxu0 0
    %538 = vmatpush2.bf16.xpose.msra.mxu0 0
    %539 = vmatprep.subr.bf16.mxu0 0
    %540 = vmatpush2.bf16.xpose.msra.mxu0 0
    %541 = vmatprep.subr.bf16.mxu0 0
    %542 = vmatpush2.bf16.xpose.msra.mxu0 0
    %543 = vmatprep.subr.bf16.mxu0 0
    %544 = vmatpush2.bf16.xpose.msra.mxu0 0
    %545 = vmatprep.subr.bf16.mxu0 0
    %546 = vmatpush2.bf16.xpose.msra.mxu0 0
    %547 = vmatprep.subr.bf16.mxu0 0
    %548 = vmatpush2.bf16.xpose.msra.mxu0 0
    %549 = vmatprep.subr.bf16.mxu0 0
    %550 = vmatpush2.bf16.xpose.msra.mxu0 0
    %551 = vmatprep.mubr.bf16.mxu0 0
    %552 = vmatmul.mubr.bf16.gmra.mxu0 %v495
    %v553 = vpop.f32.mrf.mxu0
    %v554 = vadd.f32 0.0, %v553
    %v555 = vpop.f32.mrf.mxu0
    %v556 = vpop.f32.mrf.mxu0
    %v557 = vadd.f32 0.0, %v556
    %v558 = vpop.f32.mrf.mxu0
    %559 = vmatprep.mubr.bf16.mxu0 0
    %560 = vmatmul.mubr.bf16.gmra.mxu0 %v496
    %v561 = vpop.f32.mrf.mxu0
    %v562 = vadd.f32 0.0, %v561
    %v563 = vpop.f32.mrf.mxu0
    %v564 = vpop.f32.mrf.mxu0
    %v565 = vadd.f32 0.0, %v564
    %v566 = vpop.f32.mrf.mxu0
    %567 = vmatprep.mubr.bf16.mxu0 0
    %568 = vmatmul.mubr.bf16.gmra.mxu0 %v497
    %v569 = vpop.f32.mrf.mxu0
    %v570 = vadd.f32 0.0, %v569
    %v571 = vpop.f32.mrf.mxu0
    %v572 = vpop.f32.mrf.mxu0
    %v573 = vadd.f32 0.0, %v572
    %v574 = vpop.f32.mrf.mxu0
    %575 = vmatprep.mubr.bf16.mxu0 0
    %576 = vmatmul.mubr.bf16.gmra.mxu0 %v498
    %v577 = vpop.f32.mrf.mxu0
    %v578 = vadd.f32 0.0, %v577
    %v579 = vpop.f32.mrf.mxu0
    %v580 = vpop.f32.mrf.mxu0
    %v581 = vadd.f32 0.0, %v580
    %v582 = vpop.f32.mrf.mxu0
    %583 = vmatprep.mubr.bf16.mxu0 0
    %584 = vmatmul.mubr.bf16.gmra.mxu0 %v499
    %v585 = vpop.f32.mrf.mxu0
    %v586 = vadd.f32 0.0, %v585
    %v587 = vpop.f32.mrf.mxu0
    %v588 = vpop.f32.mrf.mxu0
    %v589 = vadd.f32 0.0, %v588
    %v590 = vpop.f32.mrf.mxu0
    %591 = vmatprep.mubr.bf16.mxu0 0
    %592 = vmatmul.mubr.bf16.gmra.mxu0 %v500
    %v593 = vpop.f32.mrf.mxu0
    %v594 = vadd.f32 0.0, %v593
    %v595 = vpop.f32.mrf.mxu0
    %v596 = vpop.f32.mrf.mxu0
    %v597 = vadd.f32 0.0, %v596
    %v598 = vpop.f32.mrf.mxu0
    %599 = vmatprep.mubr.bf16.mxu0 0
    %600 = vmatmul.mubr.bf16.gmra.mxu0 %v501
    %v601 = vpop.f32.mrf.mxu0
    %v602 = vadd.f32 0.0, %v601
    %v603 = vpop.f32.mrf.mxu0
    %v604 = vpop.f32.mrf.mxu0
    %v605 = vadd.f32 0.0, %v604
    %v606 = vpop.f32.mrf.mxu0
    %607 = vmatprep.mubr.bf16.mxu0 0
    %608 = vmatmul.mubr.bf16.gmra.mxu0 %v502
    %v609 = vpop.f32.mrf.mxu0
    %v610 = vadd.f32 0.0, %v609
    %v611 = vpop.f32.mrf.mxu0
    %v612 = vpop.f32.mrf.mxu0
    %v613 = vadd.f32 0.0, %v612
    %v614 = vpop.f32.mrf.mxu0
    %615 = vdwg.mxu0
    %v616 = vadd.f32 %v503, %v554
    %v617 = vadd.f32 %v504, %v557
    %v618 = vadd.f32 %v505, %v562
    %v619 = vadd.f32 %v506, %v565
    %v620 = vadd.f32 %v507, %v570
    %v621 = vadd.f32 %v508, %v573
    %v622 = vadd.f32 %v509, %v578
    %v623 = vadd.f32 %v510, %v581
    %v624 = vadd.f32 %v511, %v586
    %v625 = vadd.f32 %v512, %v589
    %v626 = vadd.f32 %v513, %v594
    %v627 = vadd.f32 %v514, %v597
    %v628 = vadd.f32 %v515, %v602
    %v629 = vadd.f32 %v516, %v605
    %v630 = vadd.f32 %v517, %v610
    %v631 = vadd.f32 %v518, %v613
    %632 = vst [vmem:[#allocation2] sm:$0xff] %v616
    %633 = vst [vmem:[#allocation2 + $0x8] sm:$0xff] %v617
    %634 = vst [vmem:[#allocation2 + $0x10] sm:$0xff] %v618
    %635 = vst [vmem:[#allocation2 + $0x18] sm:$0xff] %v619
    %636 = vst [vmem:[#allocation2 + $0x20] sm:$0xff] %v620
    %637 = vst [vmem:[#allocation2 + $0x28] sm:$0xff] %v621
    %638 = vst [vmem:[#allocation2 + $0x30] sm:$0xff] %v622
    %639 = vst [vmem:[#allocation2 + $0x38] sm:$0xff] %v623
    %640 = vst [vmem:[#allocation2 + $0x40] sm:$0xff] %v624
    %641 = vst [vmem:[#allocation2 + $0x48] sm:$0xff] %v625
    %642 = vst [vmem:[#allocation2 + $0x50] sm:$0xff] %v626
    %643 = vst [vmem:[#allocation2 + $0x58] sm:$0xff] %v627
    %644 = vst [vmem:[#allocation2 + $0x60] sm:$0xff] %v628
    %645 = vst [vmem:[#allocation2 + $0x68] sm:$0xff] %v629
    %646 = vst [vmem:[#allocation2 + $0x70] sm:$0xff] %v630
    %647 = vst [vmem:[#allocation2 + $0x78] sm:$0xff] %v631
    // Predicated region
    $region50: #{tpu_custom_call.1} parent=1 // pred_check
      %p648 = pneg %p83
    $region51: #{tpu_custom_call.1} parent=1 // pred_check_branch
      %650 = sbr.rel (%p648) target = $region53
    $region52: #{tpu_custom_call.1} parent=1 // pred_region
      %v651 = vld [vmem:[%s5] sm:$0x1]
      %v652 = vmax.f32 %v651, 0.0
      %vm653 = vcmp.ne.f32.partialorder %v651, %v651
      %v654 = vadd.f32 %v651, 0.0
      %v655 = vand.u32 2147483647, %v651
      %v656 = vsub.f32 0.0, %v655
      %v657 = vmul.f32 %v656, 1.442695
      %v658 = vpow.pop %v657
      %v659 = vadd.f32 %v658, 1.0
      %v660 = vlog2.pop %v659
      %v661 = vmul.f32 %v660, 0.6931472
      %v662 = vmul.f32 -0.5, %v658
      %v663 = vadd.f32 %v662, 1.0
      %v664 = vmul.f32 %v663, %v658
      %v665 = vand.u32 2147483647, %v658
      %vm666 = vcmp.lt.f32.partialorder %v665, 0.0004427343
      %v667 = vsel %vm666, %v664, %v661
      %v668 = vadd.f32 %v652, %v667
      %v669 = vsel %vm653, %v654, %v668
      %v670 = vld [vmem:[%s4] sm:$0x1]
      %v671 = vld [vmem:[%s6] sm:$0x1]
      %v672 = vmul.f32 %v669, %v671
      %v673 = vadd.f32 %v670, %v672
      %v674 = vld [vmem:[#allocation2] sm:$0xff]
      %v675 = vld [vmem:[#allocation2 + $0x8] sm:$0xff]
      %v676 = vld [vmem:[#allocation2 + $0x10] sm:$0xff]
      %v677 = vld [vmem:[#allocation2 + $0x18] sm:$0xff]
      %v678 = vld [vmem:[#allocation2 + $0x20] sm:$0xff]
      %v679 = vld [vmem:[#allocation2 + $0x28] sm:$0xff]
      %v680 = vld [vmem:[#allocation2 + $0x30] sm:$0xff]
      %v681 = vld [vmem:[#allocation2 + $0x38] sm:$0xff]
      %v682 = vld [vmem:[#allocation2 + $0x40] sm:$0xff]
      %v683 = vld [vmem:[#allocation2 + $0x48] sm:$0xff]
      %v684 = vld [vmem:[#allocation2 + $0x50] sm:$0xff]
      %v685 = vld [vmem:[#allocation2 + $0x58] sm:$0xff]
      %v686 = vld [vmem:[#allocation2 + $0x60] sm:$0xff]
      %v687 = vld [vmem:[#allocation2 + $0x68] sm:$0xff]
      %v688 = vld [vmem:[#allocation2 + $0x70] sm:$0xff]
      %v689 = vld [vmem:[#allocation2 + $0x78] sm:$0xff]
      %v691 = vlaneseq
      %v692 = vshrl.u32 %v691, 7
      %v693 = vsub.s32 0, %v692
      %v694 = vrot.slane %v673, %v693
      %v696 = vadd.f32 %v674, %v694
      %v697 = vadd.f32 %v675, %v694
      %v698 = vadd.f32 %v676, %v694
      %v699 = vadd.f32 %v677, %v694
      %v700 = vadd.f32 %v678, %v694
      %v701 = vadd.f32 %v679, %v694
      %v702 = vadd.f32 %v680, %v694
      %v703 = vadd.f32 %v681, %v694
      %v704 = vadd.f32 %v682, %v694
      %v705 = vadd.f32 %v683, %v694
      %v706 = vadd.f32 %v684, %v694
      %v707 = vadd.f32 %v685, %v694
      %v708 = vadd.f32 %v686, %v694
      %v709 = vadd.f32 %v687, %v694
      %v710 = vadd.f32 %v688, %v694
      %v711 = vadd.f32 %v689, %v694
      %712 = vst [vmem:[#allocation11] sm:$0xff] %v696
      %713 = vst [vmem:[#allocation11 + $0x8] sm:$0xff] %v697
      %714 = vst [vmem:[#allocation11 + $0x10] sm:$0xff] %v698
      %715 = vst [vmem:[#allocation11 + $0x18] sm:$0xff] %v699
      %716 = vst [vmem:[#allocation11 + $0x20] sm:$0xff] %v700
      %717 = vst [vmem:[#allocation11 + $0x28] sm:$0xff] %v701
      %718 = vst [vmem:[#allocation11 + $0x30] sm:$0xff] %v702
      %719 = vst [vmem:[#allocation11 + $0x38] sm:$0xff] %v703
      %720 = vst [vmem:[#allocation11 + $0x40] sm:$0xff] %v704
      %721 = vst [vmem:[#allocation11 + $0x48] sm:$0xff] %v705
      %722 = vst [vmem:[#allocation11 + $0x50] sm:$0xff] %v706
      %723 = vst [vmem:[#allocation11 + $0x58] sm:$0xff] %v707
      %724 = vst [vmem:[#allocation11 + $0x60] sm:$0xff] %v708
      %725 = vst [vmem:[#allocation11 + $0x68] sm:$0xff] %v709
      %726 = vst [vmem:[#allocation11 + $0x70] sm:$0xff] %v710
      %727 = vst [vmem:[#allocation11 + $0x78] sm:$0xff] %v711
    $region53: #{tpu_custom_call.1} parent=1 // pred_fallthru
      _
    // Predicated region
    $region54: #{tpu_custom_call.1} parent=1 // pred_check
      _
    $region55: #{tpu_custom_call.1} parent=1 // pred_check_branch
      %729 = sbr.rel (0) target = $region57
    $region56: #{tpu_custom_call.1} parent=1 // pred_region
      %s731 = ssub.s32 2048, 2048
      %732 = vsyncadd [#allocation5], %s731
      %s733 = sshll.u32 [#allocation11], 4
      %s734 = int_to_ptr.vmem [resolvable:$true] %s733
      %739 = dma.vmem_to_hbm [thread:$0]  %s734, 2048, %s7, [#allocation5], 128, 128, 8
    $region57: #{tpu_custom_call.1} parent=1 // pred_fallthru
      _
    // Predicated region
    $region58: #{tpu_custom_call.1} parent=1 // pred_check
      _
    $region59: #{tpu_custom_call.1} parent=1 // pred_check_branch
      %741 = sbr.rel (0) target = $region61
    $region60: #{tpu_custom_call.1} parent=1 // pred_region
      %742 = dma.done [#allocation5], 2048
    $region61: #{tpu_custom_call.1} parent=1 // pred_fallthru
      _
    %743 = vsyncpa [#allocation4], 1
    %744 = vsyncpa [#allocation7], 1
    %745 = vsyncpa [#allocation10], 1
    %746 = vsyncpa [#allocation5], 1

</llo_original>
